<compile_context>
chip_gen: v6e
topology: v6e:2x2x1
jax: 0.10.0
libtpu: 0.0.40
codegen_flags: <defaults>
</compile_context>

<pallas_src>
from functools import partial

import numpy as np
import jax
import jax.numpy as jnp
from jax import lax
from jax.experimental import pallas as pl
from jax.experimental.pallas import tpu as pltpu

_EPS = 1e-12  # matches torch.nn.functional.normalize default eps


# ------------------------------ Pallas kernel -------------------------------

def _contrastive_kernel(bias_ref, x_ref, wn_ref, o_ref):
    # bias_ref: SMEM (1,) f32      = [bias]
    # x_ref:    VMEM (1, C, TN)    raw image-feature tile (channels on sublanes)
    # wn_ref:   VMEM (1, K, C)     text features, already L2-normalized AND
    #                              pre-multiplied by exp(logit_scale)
    # o_ref:    VMEM (1, K, TN)    region-text scores tile
    bias = bias_ref[0]

    x = x_ref[0].astype(jnp.float32)                        # (C, TN)
    wn = wn_ref[0].astype(jnp.float32)                      # (K, C)

    # Per-column inverse L2 norm of x (== F.normalize(x, dim=1)):
    #   1 / max(||x_col||, eps) == rsqrt(max(sum(x_col^2), eps^2))
    # Applied AFTER the matmul (diagonal column scaling commutes with the
    # left matmul), so the multiply touches (K, TN) elements, not (C, TN).
    x_ss = jnp.sum(x * x, axis=0, keepdims=True)            # (1, TN)
    inv = lax.rsqrt(jnp.maximum(x_ss, _EPS * _EPS))         # (1, TN)

    # einsum('bchw,bkc->bkhw') for this (batch, spatial tile): (K,C)@(C,TN).
    y = jnp.dot(wn, x, preferred_element_type=jnp.float32,
                precision=lax.Precision.HIGHEST)            # (K, TN)

    o_ref[0] = (y * inv + bias).astype(o_ref.dtype)


# --------------------------------- wrapper -----------------------------------

def _pick_spatial_tile(hw, batch):
    """Fixed lane-dense spatial tile; ragged final block is handled by Pallas."""
    tn = 1024
    # Never exceed the 128-padded spatial extent (tiny maps -> one full tile).
    hw_pad = ((hw + 127) // 128) * 128
    tn = min(tn, hw_pad)
    # v7x shards 'parallel' grid axes across its 2 TensorCores: when B == 1,
    # make sure there are at least 2 spatial tiles so neither core idles.
    if batch == 1:
        while tn > 128 and pl.cdiv(hw, tn) < 2:
            tn //= 2
    return tn


@jax.jit
def contrastive_head(x, w, logit_scale, bias):
    """x: (B, C, H, W), w: (B, K, C) -> (B, K, H, W) region-text scores.

    x may be f32 or bf16; the output keeps x's dtype (bf16 x roughly halves
    HBM read traffic on this memory-bound kernel, compute stays f32 in VMEM).
    """
    B, C, H, W = x.shape
    K = w.shape[1]
    HW = H * W
    TN = _pick_spatial_tile(HW, B)
    num_tiles = pl.cdiv(HW, TN)

    x3 = x.reshape(B, C, HW)                                # no transpose

    # Hoisted (B, K, C) pre-pass: L2-normalize w over C and fold in
    # exp(logit_scale) once, instead of redoing it for every spatial tile.
    w32 = w.astype(jnp.float32)
    w_ss = jnp.sum(w32 * w32, axis=-1, keepdims=True)       # (B, K, 1)
    wn = w32 * lax.rsqrt(jnp.maximum(w_ss, _EPS * _EPS)) * jnp.exp(logit_scale)

    bias_arr = jnp.reshape(bias, (1,)).astype(jnp.float32)

    out_dtype = x.dtype
    itemsize_in = jnp.dtype(x.dtype).itemsize
    itemsize_out = jnp.dtype(out_dtype).itemsize
    cost = pl.CostEstimate(
        flops=2 * B * K * C * HW,
        transcendentals=B * HW,                              # per-column rsqrt
        bytes_accessed=(B * C * HW * itemsize_in             # x reads
                        + B * K * HW * itemsize_out          # out writes
                        + B * K * C * 4))                    # w reads

    out = pl.pallas_call(
        _contrastive_kernel,
        out_shape=jax.ShapeDtypeStruct((B, K, HW), out_dtype),
        grid=(B, num_tiles),
        in_specs=[
            pl.BlockSpec(memory_space=pltpu.MemorySpace.SMEM),     # bias scalar
            pl.BlockSpec((1, C, TN), lambda b, j: (b, 0, j)),      # x tile
            pl.BlockSpec((1, K, C), lambda b, j: (b, 0, 0)),       # wn[b] (resident)
        ],
        out_specs=pl.BlockSpec((1, K, TN), lambda b, j: (b, 0, j)),
        compiler_params=pltpu.CompilerParams(
            dimension_semantics=("parallel", "parallel")),
        cost_estimate=cost,
    )(bias_arr, x3, wn)

    return out.reshape(B, K, H, W)


# ----------------------------- pure-JAX reference ----------------------------

def ref_contrastive_head(x, w, logit_scale, bias):
    xn = x / jnp.maximum(jnp.sqrt(jnp.sum(x * x, axis=1, keepdims=True)), _EPS)
    wn = w / jnp.maximum(jnp.sqrt(jnp.sum(w * w, axis=-1, keepdims=True)), _EPS)
    y = jnp.einsum("bchw,bkc->bkhw", xn, wn, precision=lax.Precision.HIGHEST)
    return y * jnp.exp(logit_scale) + bias


# ----------------------------------- main ------------------------------------

if __name__ == "__main__":
    # Small shapes consistent with the module: B=2 images, C=32 embedding dim,
    # K=8 text queries, 16x16 feature map.
    B, C, K, H, W = 2, 32, 8, 16, 16
    key = jax.random.PRNGKey(0)
    kx, kw = jax.random.split(key)
    x = jax.random.normal(kx, (B, C, H, W), jnp.float32)
    w = jax.random.normal(kw, (B, K, C), jnp.float32)

    # Parameter init exactly as in the PyTorch module.
    logit_scale = jnp.log(jnp.float32(1.0 / 0.07))
    bias = jnp.float32(-10.0)

    out = jax.block_until_ready(contrastive_head(x, w, logit_scale, bias))
    assert out.shape == (B, K, H, W), out.shape

    ref = jax.block_until_ready(ref_contrastive_head(x, w, logit_scale, bias))
    np.testing.assert_allclose(np.asarray(out), np.asarray(ref),
                               rtol=1e-4, atol=1e-4)

    print("KERNEL_OK")
</pallas_src>

<mosaic_0001>
module attributes {stable_mosaic.version = 11 : i64} {
  func.func @_contrastive_kernel(%arg0: i32, %arg1: i32, %arg2: memref<1xf32, #tpu.memory_space<smem>>, %arg3: memref<1x32x256xf32, #tpu.memory_space<vmem>>, %arg4: memref<1x8x32xf32, #tpu.memory_space<vmem>>, %arg5: memref<1x8x256xf32, #tpu.memory_space<vmem>>) attributes {dimension_semantics = [#tpu.dimension_semantics<parallel>, #tpu.dimension_semantics<parallel>], iteration_bounds = array<i64: 2, 1>, scalar_prefetch = 0 : i64, scratch_operands = 0 : i64, tpu.core_type = #tpu.core_type<tc>, window_params = [{transform_indices = @transform_0, window_bounds = array<i64: 1>}, {transform_indices = @transform_1, window_bounds = array<i64: 1, 32, 256>}, {transform_indices = @transform_2, window_bounds = array<i64: 1, 8, 32>}, {transform_indices = @transform_3, window_bounds = array<i64: 1, 8, 256>}]} {
    %c0 = arith.constant 0 : index
    %0 = memref.load %arg2[%c0] : memref<1xf32, #tpu.memory_space<smem>>
    %c0_0 = arith.constant 0 : index
    %c0_1 = arith.constant 0 : index
    %c0_2 = arith.constant 0 : index
    %1 = vector.load %arg3[%c0_0, %c0_1, %c0_2] : memref<1x32x256xf32, #tpu.memory_space<vmem>>, vector<1x32x256xf32>
    %2 = vector.shape_cast %1 : vector<1x32x256xf32> to vector<32x256xf32>
    %c0_3 = arith.constant 0 : index
    %c0_4 = arith.constant 0 : index
    %c0_5 = arith.constant 0 : index
    %3 = vector.load %arg4[%c0_3, %c0_4, %c0_5] : memref<1x8x32xf32, #tpu.memory_space<vmem>>, vector<1x8x32xf32>
    %4 = vector.shape_cast %3 : vector<1x8x32xf32> to vector<8x32xf32>
    %5 = arith.mulf %2, %2 : vector<32x256xf32>
    %cst = arith.constant dense<0.000000e+00> : vector<256xf32>
    %6 = vector.multi_reduction <add>, %5, %cst [0] : vector<32x256xf32> to vector<256xf32>
    %7 = vector.shape_cast %6 : vector<256xf32> to vector<1x256xf32>
    %cst_6 = arith.constant 1.000000e-24 : f32
    %8 = vector.broadcast %cst_6 : f32 to vector<1x256xf32>
    %9 = arith.maximumf %7, %8 : vector<1x256xf32>
    %10 = math.rsqrt %9 : vector<1x256xf32>
    %cst_7 = arith.constant dense<0.000000e+00> : vector<8x256xf32>
    %11 = tpu.matmul %4, %2, %cst_7 {dimension_numbers = #tpu.dot_dimension_numbers<[1], [0], [0], [1], [0, 0, 1, 1], [], []>, precision = #tpu.contract_precision<fp32>} : vector<8x32xf32>, vector<32x256xf32>, vector<8x256xf32> -> vector<8x256xf32>
    %12 = vector.broadcast %10 : vector<1x256xf32> to vector<8x256xf32>
    %13 = arith.mulf %11, %12 : vector<8x256xf32>
    %14 = vector.broadcast %0 : f32 to vector<8x256xf32>
    %15 = arith.addf %13, %14 : vector<8x256xf32>
    %c0_8 = arith.constant 0 : index
    %c0_9 = arith.constant 0 : index
    %c0_10 = arith.constant 0 : index
    %16 = vector.load %arg5[%c0_8, %c0_9, %c0_10] : memref<1x8x256xf32, #tpu.memory_space<vmem>>, vector<1x8x256xf32>
    %17 = vector.shape_cast %16 : vector<1x8x256xf32> to vector<8x256xf32>
    %18 = vector.shape_cast %15 : vector<8x256xf32> to vector<1x8x256xf32>
    tpu.vector_store %arg5[%c0_8, %c0_9, %c0_10], %18 {strides = array<i32>} : memref<1x8x256xf32, #tpu.memory_space<vmem>>, vector<1x8x256xf32>,
    return
  }
  func.func @transform_0(%arg0: i32, %arg1: i32) -> i32 {
    %c0_i32 = arith.constant 0 : i32
    %c0_i32_0 = arith.constant 0 : i32
    return %c0_i32 : i32
  }
  func.func @transform_1(%arg0: i32, %arg1: i32) -> (i32, i32, i32) {
    %c0_i32 = arith.constant 0 : i32
    %c0_i32_0 = arith.constant 0 : i32
    return %arg0, %c0_i32, %arg1 : i32, i32, i32
  }
  func.func @transform_2(%arg0: i32, %arg1: i32) -> (i32, i32, i32) {
    %c0_i32 = arith.constant 0 : i32
    %c0_i32_0 = arith.constant 0 : i32
    %c0_i32_1 = arith.constant 0 : i32
    return %arg0, %c0_i32, %c0_i32_0 : i32, i32, i32
  }
  func.func @transform_3(%arg0: i32, %arg1: i32) -> (i32, i32, i32) {
    %c0_i32 = arith.constant 0 : i32
    %c0_i32_0 = arith.constant 0 : i32
    return %arg0, %c0_i32, %arg1 : i32, i32, i32
  }
}

</mosaic_0001>

<llo_original>
// kernel: contrastive_head.1
$region0: #{contrastive_head.1}
  #allocation0 [shape = 'u32[]', space=smem, size = 0x4, offset = 0x4, fixed_abs, tag = 'smem constant byte address 0x4 - core index']
  #allocation1 [shape = 'u32[144,128]{1,0:T(1,128)}', space=vmem, size = 0x12000, scoped, tag = 'internal scratch']
  #allocation2 [shape = 'f32[1]{0:T(128)S(6)}', space=smem, size = 0x200, scoped, tag = 'scoped memory for contrastive_head.1']
  %s0 = inlined_call_operand.<no memory space> [shape: f32[1], index: 0, kind: input, shape index: {}]
  %s1 = inlined_call_operand.vmem [shape: f32[2,32,256], index: 1, kind: input, shape index: {}]
  %s2 = inlined_call_operand.vmem [shape: f32[2,8,32], index: 2, kind: input, shape index: {}]
  %s3 = inlined_call_operand.vmem [shape: f32[2,8,256], index: 3, kind: output, shape index: {}]
  %s4 = sld [smem:[#allocation0]]
  $region45: #{contrastive_head.1} parent=0
    _
  %s6 = ssub.s32 1, %s4
  %s7 = scalar_select 0, %s6, %s4
  %8 = sst [smem:[#allocation2]] %s0
  loop: start=0, step=1, limit=4
  $region2: #{contrastive_head.1} parent=0 // loop_pre_header
    _
  $region3: #{contrastive_head.1} parent=0 // loop_header
    %s10 = sphi 0, %s14
    %p11 = scmp.ge.s32.totalorder %s10, 4
    %s17 = sphi 0, %s29
    %s18 = sphi 0, %s25
    %s19 = sphi 0, %s17
    %s20 = sphi 0, %s18
    %s21 = sphi 0, %s19
    %s22 = sphi 0, %s20
    %s30 = sphi 0, %s30
    %s32 = sphi 0, %s30
    %s33 = sphi 0, %s32
    %s47 = sphi 0, %s33
    %s55 = sphi 0, %s57
    %s58 = sphi 0, %s55
    %s59 = sphi 0, %s58
    %s75 = sphi 0, %s59
    %s81 = sphi 0, %s83
    %s84 = sphi 0, %s81
    %s85 = sphi 0, %s84
    %s101 = sphi 0, %s85
    %s109 = sphi 0, %s111
    %s112 = sphi 0, %s109
    %s113 = sphi 0, %s112
    %s129 = sphi 0, %s113
  $region4: #{contrastive_head.1} parent=0 // loop_header_branch
    %13 = sbr.rel (%p11) target = $region8
  $region5: #{contrastive_head.1} parent=0 // loop_body
    %s15 = ssub.s32 %s10, 1
    %s16 = ssub.s32 %s10, 2
    %s23 = sadd.s32 1, %s18
    %p24 = scmp.ge.s32.totalorder %s23, 1
    %s25 = scalar_select %p24, 0, %s23
    %s26 = sadd.s32 1, %s17
    %s27 = scalar_select %p24, %s26, %s17
    %p28 = scmp.ge.s32.totalorder %s27, 2
    %s29 = scalar_select %p28, 0, %s27
    %s31 = sadd.s32 %s30, 1
    %p34 = scmp.eq.s32.totalorder %s10, 1
    %p35 = scmp.ne.s32.totalorder %s30, %s32
    %p36 = scmp.eq.s32.totalorder %s10, 0
    %p37 = por %p35, %p36
    %p38 = scmp.ne.s32.totalorder %s30, %s32
    %p39 = scmp.eq.s32.totalorder %s15, 1
    %p40 = por %p38, %p39
    %p41 = scmp.ne.s32.totalorder %s32, %s33
    %p42 = scmp.eq.s32.totalorder %s15, 0
    %p43 = por %p41, %p42
    %p44 = scmp.ne.s32.totalorder %s32, %s33
    %p45 = scmp.eq.s32.totalorder %s16, 1
    %p46 = por %p44, %p45
    %p48 = scmp.ne.s32.totalorder %s33, %s47
    %p49 = scmp.eq.s32.totalorder %s16, 0
    %p50 = por %p48, %p49
    %s51 = ssub.s32 %s17, %s29
    %s52 = ssub.s32 %s18, %s25
    %s53 = sor.u32 %s51, %s52
    %p54 = scmp.eq.s32.totalorder %s53, 0
    %s56 = sadd.s32 %s55, 1
    %s57 = scalar_select %p54, %s55, %s56
    %p60 = pneg %p54
    %p61 = scmp.eq.s32.totalorder %s10, 1
    %p62 = por %p60, %p61
    %p63 = scmp.ne.s32.totalorder %s55, %s58
    %p64 = scmp.eq.s32.totalorder %s10, 0
    %p65 = por %p63, %p64
    %p66 = scmp.ne.s32.totalorder %s55, %s58
    %p67 = scmp.eq.s32.totalorder %s15, 1
    %p68 = por %p66, %p67
    %p69 = scmp.ne.s32.totalorder %s58, %s59
    %p70 = scmp.eq.s32.totalorder %s15, 0
    %p71 = por %p69, %p70
    %p72 = scmp.ne.s32.totalorder %s58, %s59
    %p73 = scmp.eq.s32.totalorder %s16, 1
    %p74 = por %p72, %p73
    %p76 = scmp.ne.s32.totalorder %s59, %s75
    %p77 = scmp.eq.s32.totalorder %s16, 0
    %p78 = por %p76, %p77
    %s79 = ssub.s32 %s17, %s29
    %p80 = scmp.eq.s32.totalorder %s79, 0
    %s82 = sadd.s32 %s81, 1
    %s83 = scalar_select %p80, %s81, %s82
    %p86 = pneg %p80
    %p87 = scmp.eq.s32.totalorder %s10, 1
    %p88 = por %p86, %p87
    %p89 = scmp.ne.s32.totalorder %s81, %s84
    %p90 = scmp.eq.s32.totalorder %s10, 0
    %p91 = por %p89, %p90
    %p92 = scmp.ne.s32.totalorder %s81, %s84
    %p93 = scmp.eq.s32.totalorder %s15, 1
    %p94 = por %p92, %p93
    %p95 = scmp.ne.s32.totalorder %s84, %s85
    %p96 = scmp.eq.s32.totalorder %s15, 0
    %p97 = por %p95, %p96
    %p98 = scmp.ne.s32.totalorder %s84, %s85
    %p99 = scmp.eq.s32.totalorder %s16, 1
    %p100 = por %p98, %p99
    %p102 = scmp.ne.s32.totalorder %s85, %s101
    %p103 = scmp.eq.s32.totalorder %s16, 0
    %p104 = por %p102, %p103
    %s105 = ssub.s32 %s17, %s29
    %s106 = ssub.s32 %s18, %s25
    %s107 = sor.u32 %s105, %s106
    %p108 = scmp.eq.s32.totalorder %s107, 0
    %s110 = sadd.s32 %s109, 1
    %s111 = scalar_select %p108, %s109, %s110
    %p114 = pneg %p108
    %p115 = scmp.eq.s32.totalorder %s10, 1
    %p116 = por %p114, %p115
    %p117 = scmp.ne.s32.totalorder %s109, %s112
    %p118 = scmp.eq.s32.totalorder %s10, 0
    %p119 = por %p117, %p118
    %p120 = scmp.ne.s32.totalorder %s109, %s112
    %p121 = scmp.eq.s32.totalorder %s15, 1
    %p122 = por %p120, %p121
    %p123 = scmp.ne.s32.totalorder %s112, %s113
    %p124 = scmp.eq.s32.totalorder %s15, 0
    %p125 = por %p123, %p124
    %p126 = scmp.ne.s32.totalorder %s112, %s113
    %p127 = scmp.eq.s32.totalorder %s16, 1
    %p128 = por %p126, %p127
    %p130 = scmp.ne.s32.totalorder %s113, %s129
    %p131 = scmp.eq.s32.totalorder %s16, 0
    %p132 = por %p130, %p131
    %p133 = scmp.le.s32.totalorder 1, %s10
    %p134 = scmp.lt.s32.totalorder %s10, 3
    %p135 = pnand %p133, %p134
    %p136 = pneg %p135
    // Predicated region
    $region9: #{contrastive_head.1} parent=5 // pred_check
      _
    $region10: #{contrastive_head.1} parent=5 // pred_check_branch
      %138 = sbr.rel (%p135) target = $region12
    $region11: #{contrastive_head.1} parent=5 // pred_region
      %s139 = ssub.s32 %s10, 1
      // Predicated region
      $region13: #{contrastive_head.1} parent=11 // pred_check
        %p140 = pneg %p43
      $region14: #{contrastive_head.1} parent=11 // pred_check_branch
        %142 = sbr.rel (%p140) target = $region16
      $region15: #{contrastive_head.1} parent=11 // pred_region
        _
      $region16: #{contrastive_head.1} parent=11 // pred_fallthru
        _
    $region12: #{contrastive_head.1} parent=5 // pred_fallthru
      _
    %p143 = scmp.lt.s32.totalorder %s10, 2
    // Predicated region
    $region17: #{contrastive_head.1} parent=5 // pred_check
      %p144 = pneg %p143
    $region18: #{contrastive_head.1} parent=5 // pred_check_branch
      %146 = sbr.rel (%p144) target = $region20
    $region19: #{contrastive_head.1} parent=5 // pred_region
      // Predicated region
      $region21: #{contrastive_head.1} parent=19 // pred_check
        %p147 = pneg %p65
      $region22: #{contrastive_head.1} parent=19 // pred_check_branch
        %149 = sbr.rel (%p147) target = $region24
      $region23: #{contrastive_head.1} parent=19 // pred_region
        %s150 = smul.u32 2, %s18
        %p151 = scmp.lt.s32.totalorder %s17, 1
        %s152 = scalar_select %p151, %s17, 1
        %p153 = scmp.lt.s32.totalorder %s150, 1
        %s154 = scalar_select %p153, %s150, 1
        %s155 = smul.addr %s152, 8
        %s156 = sadd.s32 %s154, %s155
        %s157 = smul.addr %s156, 8
        %s158 = scalar_lea.vmem %s1, %s157
        %s159 = smul.u32 2, %s18
      $region24: #{contrastive_head.1} parent=19 // pred_fallthru
        _
      // Predicated region
      $region25: #{contrastive_head.1} parent=19 // pred_check
        %p160 = pneg %p91
      $region26: #{contrastive_head.1} parent=19 // pred_check_branch
        %162 = sbr.rel (%p160) target = $region28
      $region27: #{contrastive_head.1} parent=19 // pred_region
        %p163 = scmp.lt.s32.totalorder %s17, 1
        %s164 = scalar_select %p163, %s17, 1
        %s165 = smul.addr %s164, 8
        %s166 = scalar_lea.vmem %s2, %s165
      $region28: #{contrastive_head.1} parent=19 // pred_fallthru
        _
    $region20: #{contrastive_head.1} parent=5 // pred_fallthru
      _
    %p167 = scmp.le.s32.totalorder 1, %s10
    %p168 = scmp.lt.s32.totalorder %s10, 3
    %p169 = pnand %p167, %p168
    %p170 = pneg %p169
    // Predicated region
    $region29: #{contrastive_head.1} parent=5 // pred_check
      _
    $region30: #{contrastive_head.1} parent=5 // pred_check_branch
      %172 = sbr.rel (%p169) target = $region32
    $region31: #{contrastive_head.1} parent=5 // pred_region
      %s173 = ssub.s32 %s10, 1
      %p174 = pneg %p43
      %p175 = pneg %p40
      %s176 = smul.u32 2, %s20
      %p177 = scmp.lt.s32.totalorder %s19, 1
      %s178 = scalar_select %p177, %s19, 1
      %p179 = scmp.lt.s32.totalorder %s176, 1
      %s180 = scalar_select %p179, %s176, 1
      %s181 = smul.addr %s178, 8
      %s182 = sadd.s32 %s180, %s181
      %s183 = smul.addr %s182, 8
      %s184 = scalar_lea.vmem %s1, %s183
      %p185 = pneg %p71
      %p186 = pneg %p68
      %p187 = scmp.lt.s32.totalorder %s19, 1
      %s188 = scalar_select %p187, %s19, 1
      %s189 = smul.addr %s188, 8
      %s190 = scalar_lea.vmem %s2, %s189
      %p191 = pneg %p97
      %p192 = pneg %p94
      %p193 = pneg %p125
      %p194 = pneg %p122
      %s195 = smul.u32 2, %s20
      %p196 = scmp.lt.s32.totalorder %s19, 1
      %s197 = scalar_select %p196, %s19, 1
      %p198 = scmp.lt.s32.totalorder %s195, 1
      %s199 = scalar_select %p198, %s195, 1
      %s200 = smul.addr %s197, 2
      %s201 = sadd.s32 %s199, %s200
      %s202 = smul.addr %s201, 8
      %s203 = scalar_lea.vmem %s3, %s202
      %s204 = smul.u32 2, %s20
      %p205 = scmp.lt.s32.totalorder %s19, 1
      %s206 = scalar_select %p205, %s19, 1
      %p207 = scmp.lt.s32.totalorder %s204, 1
      %s208 = scalar_select %p207, %s204, 1
      %s209 = smul.addr %s206, 8
      %s210 = sadd.s32 %s208, %s209
      %s211 = smul.addr %s210, 8
      %s212 = scalar_lea.vmem %s1, %s211
      %s213 = smul.u32 2, %s20
      %p214 = scmp.lt.s32.totalorder %s19, 1
      %s215 = scalar_select %p214, %s19, 1
      %s216 = smul.addr %s215, 8
      %s217 = scalar_lea.vmem %s2, %s216
      %s218 = smul.u32 2, %s20
      %p219 = scmp.lt.s32.totalorder %s19, 1
      %s220 = scalar_select %p219, %s19, 1
      %p221 = scmp.lt.s32.totalorder %s218, 1
      %s222 = scalar_select %p221, %s218, 1
      %s223 = smul.addr %s220, 2
      %s224 = sadd.s32 %s222, %s223
      %s225 = smul.addr %s224, 8
      %s226 = scalar_lea.vmem %s3, %s225
      %s227 = smul.u32 2, %s20
      %s228 = sld [smem:[#allocation2]]
      %v229 = vld [vmem:[%s212] sm:$0xff]
      %v230 = vld [vmem:[%s212 + $0x8] sm:$0xff]
      %v231 = vld [vmem:[%s212 + $0x10] sm:$0xff]
      %v232 = vld [vmem:[%s212 + $0x18] sm:$0xff]
      %v233 = vld [vmem:[%s212 + $0x20] sm:$0xff]
      %v234 = vld [vmem:[%s212 + $0x28] sm:$0xff]
      %v235 = vld [vmem:[%s212 + $0x30] sm:$0xff]
      %v236 = vld [vmem:[%s212 + $0x38] sm:$0xff]
      %v237 = vld [vmem:[%s217] sm:$0xff]
      %v238 = vmul.f32 %v229, %v229
      %v239 = vmul.f32 %v230, %v230
      %v240 = vmul.f32 %v231, %v231
      %v241 = vmul.f32 %v232, %v232
      %v242 = vmul.f32 %v233, %v233
      %v243 = vmul.f32 %v234, %v234
      %v244 = vmul.f32 %v235, %v235
      %v245 = vmul.f32 %v236, %v236
      %v246 = vadd.f32 %v238, %v240
      %v247 = vadd.f32 %v246, %v242
      %v248 = vadd.f32 %v247, %v244
      %v249 = vrot.slane %v248, 4
      %v250 = vadd.f32 %v248, %v249
      %v251 = vrot.slane %v250, 2
      %v252 = vadd.f32 %v250, %v251
      %v253 = vrot.slane %v252, 1
      %v254 = vadd.f32 %v252, %v253
      %v255 = vadd.f32 %v239, %v241
      %v256 = vadd.f32 %v255, %v243
      %v257 = vadd.f32 %v256, %v245
      %v258 = vrot.slane %v257, 4
      %v259 = vadd.f32 %v257, %v258
      %v260 = vrot.slane %v259, 2
      %v261 = vadd.f32 %v259, %v260
      %v262 = vrot.slane %v261, 1
      %v263 = vadd.f32 %v261, %v262
      %v264 = vmax.f32 %v254, 1e-24
      %v265 = vmax.f32 %v263, 1e-24
      %v266 = vrsqrt.pop %v264
      %v267 = vrsqrt.pop %v265
      %vm268 = vcmask 261120
      %v270 = vsel %vm268, %v237, 0
      %272 = vmatprep.subr.mxu0 0.0
      %273 = vmatpush1.msra.mxu0 0.0
      %274 = vmatprep.subr.mxu0 0.0
      %275 = vmatpush1.msra.mxu0 0.0
      %276 = vmatprep.subr.mxu0 0.0
      %277 = vmatpush1.msra.mxu0 0.0
      %278 = vmatprep.subr.mxu0 0.0
      %279 = vmatpush1.msra.mxu0 0.0
      %280 = vmatprep.subr.mxu0 0.0
      %281 = vmatpush1.msra.mxu0 0.0
      %282 = vmatprep.subr.mxu0 0.0
      %283 = vmatpush1.msra.mxu0 0.0
      %284 = vmatprep.subr.mxu0 0.0
      %285 = vmatpush1.msra.mxu0 0.0
      %286 = vmatprep.subr.mxu0 0.0
      %287 = vmatpush1.msra.mxu0 0.0
      %288 = vmatprep.subr.mxu0 0.0
      %289 = vmatpush1.msra.mxu0 0.0
      %290 = vmatprep.subr.mxu0 0.0
      %291 = vmatpush1.msra.mxu0 0.0
      %292 = vmatprep.subr.mxu0 0.0
      %293 = vmatpush1.msra.mxu0 0.0
      %294 = vmatprep.subr.mxu0 0.0
      %295 = vmatpush1.msra.mxu0 0.0
      %v296 = vand.u32 %v236, 4294901760
      %297 = vmatprep.subr.mxu0 %v296
      %v298 = vand.u32 %v235, 4294901760
      %299 = vmatpush1.msra.mxu0 %v298
      %v300 = vand.u32 %v234, 4294901760
      %301 = vmatprep.subr.mxu0 %v300
      %v302 = vand.u32 %v233, 4294901760
      %303 = vmatpush1.msra.mxu0 %v302
      %v304 = vand.u32 %v232, 4294901760
      %305 = vmatprep.subr.mxu0 %v304
      %v306 = vand.u32 %v231, 4294901760
      %307 = vmatpush1.msra.mxu0 %v306
      %v308 = vand.u32 %v230, 4294901760
      %309 = vmatprep.subr.mxu0 %v308
      %v310 = vand.u32 %v229, 4294901760
      %311 = vmatpush1.msra.mxu0 %v310
      %312 = vmatprep.subr.mxu0 0.0
      %313 = vmatpush2.msra.mxu0 0.0
      %314 = vmatprep.subr.mxu0 0.0
      %315 = vmatpush2.msra.mxu0 0.0
      %316 = vmatprep.subr.mxu0 0.0
      %317 = vmatpush2.msra.mxu0 0.0
      %318 = vmatprep.subr.mxu0 0.0
      %319 = vmatpush2.msra.mxu0 0.0
      %320 = vmatprep.subr.mxu0 0.0
      %321 = vmatpush2.msra.mxu0 0.0
      %322 = vmatprep.subr.mxu0 0.0
      %323 = vmatpush2.msra.mxu0 0.0
      %324 = vmatprep.subr.mxu0 0.0
      %325 = vmatpush2.msra.mxu0 0.0
      %326 = vmatprep.subr.mxu0 0.0
      %327 = vmatpush2.msra.mxu0 0.0
      %328 = vmatprep.subr.mxu0 0.0
      %329 = vmatpush2.msra.mxu0 0.0
      %330 = vmatprep.subr.mxu0 0.0
      %331 = vmatpush2.msra.mxu0 0.0
      %332 = vmatprep.subr.mxu0 0.0
      %333 = vmatpush2.msra.mxu0 0.0
      %334 = vmatprep.subr.mxu0 0.0
      %335 = vmatpush2.msra.mxu0 0.0
      %336 = vmatprep.subr.mxu0 0.0
      %337 = vmatpush2.msra.mxu0 0.0
      %338 = vmatprep.subr.mxu0 0.0
      %339 = vmatpush2.msra.mxu0 0.0
      %340 = vmatprep.subr.mxu0 0.0
      %341 = vmatpush2.msra.mxu0 0.0
      %342 = vmatprep.subr.mxu0 0.0
      %343 = vmatpush2.msra.mxu0 0.0
      %344 = vmatprep.mubr.f32.mxu0 0.0
      %v345 = vand.u32 %v270, 4294901760
      %v346 = vsub.f32 %v270, %v345
      %v347 = vand.u32 %v346, 4294901760
      %v348 = vsub.f32 %v346, %v347
      %v349 = vand.u32 %v348, 4294901760
      %350 = vmatmul.mubr.f32.gmra.mxu0 %v349
      %v351 = vpop.f32.mrf.mxu0
      %v352 = vadd.f32 0.0, %v351
      %v353 = vpop.f32.mrf.mxu0
      %v354 = vadd.f32 0.0, %v353
      %355 = vdwg.mxu0
      %356 = vmatprep.subr.mxu0 0.0
      %357 = vmatpush1.msra.mxu0 0.0
      %358 = vmatprep.subr.mxu0 0.0
      %359 = vmatpush1.msra.mxu0 0.0
      %360 = vmatprep.subr.mxu0 0.0
      %361 = vmatpush1.msra.mxu0 0.0
      %362 = vmatprep.subr.mxu0 0.0
      %363 = vmatpush1.msra.mxu0 0.0
      %364 = vmatprep.subr.mxu0 0.0
      %365 = vmatpush1.msra.mxu0 0.0
      %366 = vmatprep.subr.mxu0 0.0
      %367 = vmatpush1.msra.mxu0 0.0
      %368 = vmatprep.subr.mxu0 0.0
      %369 = vmatpush1.msra.mxu0 0.0
      %370 = vmatprep.subr.mxu0 0.0
      %371 = vmatpush1.msra.mxu0 0.0
      %372 = vmatprep.subr.mxu0 0.0
      %373 = vmatpush1.msra.mxu0 0.0
      %374 = vmatprep.subr.mxu0 0.0
      %375 = vmatpush1.msra.mxu0 0.0
      %376 = vmatprep.subr.mxu0 0.0
      %377 = vmatpush1.msra.mxu0 0.0
      %378 = vmatprep.subr.mxu0 0.0
      %379 = vmatpush1.msra.mxu0 0.0
      %v380 = vand.u32 %v236, 4294901760
      %v381 = vsub.f32 %v236, %v380
      %v382 = vand.u32 %v381, 4294901760
      %v383 = vsub.f32 %v381, %v382
      %v384 = vand.u32 %v383, 4294901760
      %385 = vmatprep.subr.mxu0 %v384
      %v386 = vand.u32 %v235, 4294901760
      %v387 = vsub.f32 %v235, %v386
      %v388 = vand.u32 %v387, 4294901760
      %v389 = vsub.f32 %v387, %v388
      %v390 = vand.u32 %v389, 4294901760
      %391 = vmatpush1.msra.mxu0 %v390
      %v392 = vand.u32 %v234, 4294901760
      %v393 = vsub.f32 %v234, %v392
      %v394 = vand.u32 %v393, 4294901760
      %v395 = vsub.f32 %v393, %v394
      %v396 = vand.u32 %v395, 4294901760
      %397 = vmatprep.subr.mxu0 %v396
      %v398 = vand.u32 %v233, 4294901760
      %v399 = vsub.f32 %v233, %v398
      %v400 = vand.u32 %v399, 4294901760
      %v401 = vsub.f32 %v399, %v400
      %v402 = vand.u32 %v401, 4294901760
      %403 = vmatpush1.msra.mxu0 %v402
      %v404 = vand.u32 %v232, 4294901760
      %v405 = vsub.f32 %v232, %v404
      %v406 = vand.u32 %v405, 4294901760
      %v407 = vsub.f32 %v405, %v406
      %v408 = vand.u32 %v407, 4294901760
      %409 = vmatprep.subr.mxu0 %v408
      %v410 = vand.u32 %v231, 4294901760
      %v411 = vsub.f32 %v231, %v410
      %v412 = vand.u32 %v411, 4294901760
      %v413 = vsub.f32 %v411, %v412
      %v414 = vand.u32 %v413, 4294901760
      %415 = vmatpush1.msra.mxu0 %v414
      %v416 = vand.u32 %v230, 4294901760
      %v417 = vsub.f32 %v230, %v416
      %v418 = vand.u32 %v417, 4294901760
      %v419 = vsub.f32 %v417, %v418
      %v420 = vand.u32 %v419, 4294901760
      %421 = vmatprep.subr.mxu0 %v420
      %v422 = vand.u32 %v229, 4294901760
      %v423 = vsub.f32 %v229, %v422
      %v424 = vand.u32 %v423, 4294901760
      %v425 = vsub.f32 %v423, %v424
      %v426 = vand.u32 %v425, 4294901760
      %427 = vmatpush1.msra.mxu0 %v426
      %428 = vmatprep.subr.mxu0 0.0
      %429 = vmatpush2.msra.mxu0 0.0
      %430 = vmatprep.subr.mxu0 0.0
      %431 = vmatpush2.msra.mxu0 0.0
      %432 = vmatprep.subr.mxu0 0.0
      %433 = vmatpush2.msra.mxu0 0.0
      %434 = vmatprep.subr.mxu0 0.0
      %435 = vmatpush2.msra.mxu0 0.0
      %436 = vmatprep.subr.mxu0 0.0
      %437 = vmatpush2.msra.mxu0 0.0
      %438 = vmatprep.subr.mxu0 0.0
      %439 = vmatpush2.msra.mxu0 0.0
      %440 = vmatprep.subr.mxu0 0.0
      %441 = vmatpush2.msra.mxu0 0.0
      %442 = vmatprep.subr.mxu0 0.0
      %443 = vmatpush2.msra.mxu0 0.0
      %444 = vmatprep.subr.mxu0 0.0
      %445 = vmatpush2.msra.mxu0 0.0
      %446 = vmatprep.subr.mxu0 0.0
      %447 = vmatpush2.msra.mxu0 0.0
      %448 = vmatprep.subr.mxu0 0.0
      %449 = vmatpush2.msra.mxu0 0.0
      %450 = vmatprep.subr.mxu0 0.0
      %451 = vmatpush2.msra.mxu0 0.0
      %452 = vmatprep.subr.mxu0 0.0
      %453 = vmatpush2.msra.mxu0 0.0
      %454 = vmatprep.subr.mxu0 0.0
      %455 = vmatpush2.msra.mxu0 0.0
      %456 = vmatprep.subr.mxu0 0.0
      %457 = vmatpush2.msra.mxu0 0.0
      %458 = vmatprep.subr.mxu0 0.0
      %459 = vmatpush2.msra.mxu0 0.0
      %460 = vmatprep.mubr.f32.mxu0 0.0
      %v461 = vand.u32 %v270, 4294901760
      %462 = vmatmul.mubr.f32.gmra.mxu0 %v461
      %v463 = vpop.f32.mrf.mxu0
      %v464 = vadd.f32 %v352, %v463
      %v465 = vpop.f32.mrf.mxu0
      %v466 = vadd.f32 %v354, %v465
      %467 = vdwg.mxu0
      %468 = vmatprep.subr.mxu0 0.0
      %469 = vmatpush1.msra.mxu0 0.0
      %470 = vmatprep.subr.mxu0 0.0
      %471 = vmatpush1.msra.mxu0 0.0
      %472 = vmatprep.subr.mxu0 0.0
      %473 = vmatpush1.msra.mxu0 0.0
      %474 = vmatprep.subr.mxu0 0.0
      %475 = vmatpush1.msra.mxu0 0.0
      %476 = vmatprep.subr.mxu0 0.0
      %477 = vmatpush1.msra.mxu0 0.0
      %478 = vmatprep.subr.mxu0 0.0
      %479 = vmatpush1.msra.mxu0 0.0
      %480 = vmatprep.subr.mxu0 0.0
      %481 = vmatpush1.msra.mxu0 0.0
      %482 = vmatprep.subr.mxu0 0.0
      %483 = vmatpush1.msra.mxu0 0.0
      %484 = vmatprep.subr.mxu0 0.0
      %485 = vmatpush1.msra.mxu0 0.0
      %486 = vmatprep.subr.mxu0 0.0
      %487 = vmatpush1.msra.mxu0 0.0
      %488 = vmatprep.subr.mxu0 0.0
      %489 = vmatpush1.msra.mxu0 0.0
      %490 = vmatprep.subr.mxu0 0.0
      %491 = vmatpush1.msra.mxu0 0.0
      %v492 = vand.u32 %v236, 4294901760
      %v493 = vsub.f32 %v236, %v492
      %494 = vmatprep.subr.mxu0 %v493
      %v495 = vand.u32 %v235, 4294901760
      %v496 = vsub.f32 %v235, %v495
      %497 = vmatpush1.msra.mxu0 %v496
      %v498 = vand.u32 %v234, 4294901760
      %v499 = vsub.f32 %v234, %v498
      %500 = vmatprep.subr.mxu0 %v499
      %v501 = vand.u32 %v233, 4294901760
      %v502 = vsub.f32 %v233, %v501
      %503 = vmatpush1.msra.mxu0 %v502
      %v504 = vand.u32 %v232, 4294901760
      %v505 = vsub.f32 %v232, %v504
      %506 = vmatprep.subr.mxu0 %v505
      %v507 = vand.u32 %v231, 4294901760
      %v508 = vsub.f32 %v231, %v507
      %509 = vmatpush1.msra.mxu0 %v508
      %v510 = vand.u32 %v230, 4294901760
      %v511 = vsub.f32 %v230, %v510
      %512 = vmatprep.subr.mxu0 %v511
      %v513 = vand.u32 %v229, 4294901760
      %v514 = vsub.f32 %v229, %v513
      %515 = vmatpush1.msra.mxu0 %v514
      %516 = vmatprep.subr.mxu0 0.0
      %517 = vmatpush2.msra.mxu0 0.0
      %518 = vmatprep.subr.mxu0 0.0
      %519 = vmatpush2.msra.mxu0 0.0
      %520 = vmatprep.subr.mxu0 0.0
      %521 = vmatpush2.msra.mxu0 0.0
      %522 = vmatprep.subr.mxu0 0.0
      %523 = vmatpush2.msra.mxu0 0.0
      %524 = vmatprep.subr.mxu0 0.0
      %525 = vmatpush2.msra.mxu0 0.0
      %526 = vmatprep.subr.mxu0 0.0
      %527 = vmatpush2.msra.mxu0 0.0
      %528 = vmatprep.subr.mxu0 0.0
      %529 = vmatpush2.msra.mxu0 0.0
      %530 = vmatprep.subr.mxu0 0.0
      %531 = vmatpush2.msra.mxu0 0.0
      %532 = vmatprep.subr.mxu0 0.0
      %533 = vmatpush2.msra.mxu0 0.0
      %534 = vmatprep.subr.mxu0 0.0
      %535 = vmatpush2.msra.mxu0 0.0
      %536 = vmatprep.subr.mxu0 0.0
      %537 = vmatpush2.msra.mxu0 0.0
      %538 = vmatprep.subr.mxu0 0.0
      %539 = vmatpush2.msra.mxu0 0.0
      %540 = vmatprep.subr.mxu0 0.0
      %541 = vmatpush2.msra.mxu0 0.0
      %542 = vmatprep.subr.mxu0 0.0
      %543 = vmatpush2.msra.mxu0 0.0
      %544 = vmatprep.subr.mxu0 0.0
      %545 = vmatpush2.msra.mxu0 0.0
      %546 = vmatprep.subr.mxu0 0.0
      %547 = vmatpush2.msra.mxu0 0.0
      %548 = vmatprep.mubr.f32.mxu0 0.0
      %v549 = vand.u32 %v270, 4294901760
      %v550 = vsub.f32 %v270, %v549
      %551 = vmatmul.mubr.f32.gmra.mxu0 %v550
      %v552 = vpop.f32.mrf.mxu0
      %v553 = vadd.f32 %v464, %v552
      %v554 = vpop.f32.mrf.mxu0
      %v555 = vadd.f32 %v466, %v554
      %556 = vdwg.mxu0
      %557 = vmatprep.subr.mxu0 0.0
      %558 = vmatpush1.msra.mxu0 0.0
      %559 = vmatprep.subr.mxu0 0.0
      %560 = vmatpush1.msra.mxu0 0.0
      %561 = vmatprep.subr.mxu0 0.0
      %562 = vmatpush1.msra.mxu0 0.0
      %563 = vmatprep.subr.mxu0 0.0
      %564 = vmatpush1.msra.mxu0 0.0
      %565 = vmatprep.subr.mxu0 0.0
      %566 = vmatpush1.msra.mxu0 0.0
      %567 = vmatprep.subr.mxu0 0.0
      %568 = vmatpush1.msra.mxu0 0.0
      %569 = vmatprep.subr.mxu0 0.0
      %570 = vmatpush1.msra.mxu0 0.0
      %571 = vmatprep.subr.mxu0 0.0
      %572 = vmatpush1.msra.mxu0 0.0
      %573 = vmatprep.subr.mxu0 0.0
      %574 = vmatpush1.msra.mxu0 0.0
      %575 = vmatprep.subr.mxu0 0.0
      %576 = vmatpush1.msra.mxu0 0.0
      %577 = vmatprep.subr.mxu0 0.0
      %578 = vmatpush1.msra.mxu0 0.0
      %579 = vmatprep.subr.mxu0 0.0
      %580 = vmatpush1.msra.mxu0 0.0
      %v581 = vand.u32 %v236, 4294901760
      %582 = vmatprep.subr.mxu0 %v581
      %v583 = vand.u32 %v235, 4294901760
      %584 = vmatpush1.msra.mxu0 %v583
      %v585 = vand.u32 %v234, 4294901760
      %586 = vmatprep.subr.mxu0 %v585
      %v587 = vand.u32 %v233, 4294901760
      %588 = vmatpush1.msra.mxu0 %v587
      %v589 = vand.u32 %v232, 4294901760
      %590 = vmatprep.subr.mxu0 %v589
      %v591 = vand.u32 %v231, 4294901760
      %592 = vmatpush1.msra.mxu0 %v591
      %v593 = vand.u32 %v230, 4294901760
      %594 = vmatprep.subr.mxu0 %v593
      %v595 = vand.u32 %v229, 4294901760
      %596 = vmatpush1.msra.mxu0 %v595
      %597 = vmatprep.subr.mxu0 0.0
      %598 = vmatpush2.msra.mxu0 0.0
      %599 = vmatprep.subr.mxu0 0.0
      %600 = vmatpush2.msra.mxu0 0.0
      %601 = vmatprep.subr.mxu0 0.0
      %602 = vmatpush2.msra.mxu0 0.0
      %603 = vmatprep.subr.mxu0 0.0
      %604 = vmatpush2.msra.mxu0 0.0
      %605 = vmatprep.subr.mxu0 0.0
      %606 = vmatpush2.msra.mxu0 0.0
      %607 = vmatprep.subr.mxu0 0.0
      %608 = vmatpush2.msra.mxu0 0.0
      %609 = vmatprep.subr.mxu0 0.0
      %610 = vmatpush2.msra.mxu0 0.0
      %611 = vmatprep.subr.mxu0 0.0
      %612 = vmatpush2.msra.mxu0 0.0
      %613 = vmatprep.subr.mxu0 0.0
      %614 = vmatpush2.msra.mxu0 0.0
      %615 = vmatprep.subr.mxu0 0.0
      %616 = vmatpush2.msra.mxu0 0.0
      %617 = vmatprep.subr.mxu0 0.0
      %618 = vmatpush2.msra.mxu0 0.0
      %619 = vmatprep.subr.mxu0 0.0
      %620 = vmatpush2.msra.mxu0 0.0
      %621 = vmatprep.subr.mxu0 0.0
      %622 = vmatpush2.msra.mxu0 0.0
      %623 = vmatprep.subr.mxu0 0.0
      %624 = vmatpush2.msra.mxu0 0.0
      %625 = vmatprep.subr.mxu0 0.0
      %626 = vmatpush2.msra.mxu0 0.0
      %627 = vmatprep.subr.mxu0 0.0
      %628 = vmatpush2.msra.mxu0 0.0
      %629 = vmatprep.mubr.f32.mxu0 0.0
      %v630 = vand.u32 %v270, 4294901760
      %v631 = vsub.f32 %v270, %v630
      %v632 = vand.u32 %v631, 4294901760
      %633 = vmatmul.mubr.f32.gmra.mxu0 %v632
      %v634 = vpop.f32.mrf.mxu0
      %v635 = vadd.f32 %v553, %v634
      %v636 = vpop.f32.mrf.mxu0
      %v637 = vadd.f32 %v555, %v636
      %638 = vdwg.mxu0
      %639 = vmatprep.subr.mxu0 0.0
      %640 = vmatpush1.msra.mxu0 0.0
      %641 = vmatprep.subr.mxu0 0.0
      %642 = vmatpush1.msra.mxu0 0.0
      %643 = vmatprep.subr.mxu0 0.0
      %644 = vmatpush1.msra.mxu0 0.0
      %645 = vmatprep.subr.mxu0 0.0
      %646 = vmatpush1.msra.mxu0 0.0
      %647 = vmatprep.subr.mxu0 0.0
      %648 = vmatpush1.msra.mxu0 0.0
      %649 = vmatprep.subr.mxu0 0.0
      %650 = vmatpush1.msra.mxu0 0.0
      %651 = vmatprep.subr.mxu0 0.0
      %652 = vmatpush1.msra.mxu0 0.0
      %653 = vmatprep.subr.mxu0 0.0
      %654 = vmatpush1.msra.mxu0 0.0
      %655 = vmatprep.subr.mxu0 0.0
      %656 = vmatpush1.msra.mxu0 0.0
      %657 = vmatprep.subr.mxu0 0.0
      %658 = vmatpush1.msra.mxu0 0.0
      %659 = vmatprep.subr.mxu0 0.0
      %660 = vmatpush1.msra.mxu0 0.0
      %661 = vmatprep.subr.mxu0 0.0
      %662 = vmatpush1.msra.mxu0 0.0
      %v663 = vand.u32 %v236, 4294901760
      %v664 = vsub.f32 %v236, %v663
      %v665 = vand.u32 %v664, 4294901760
      %666 = vmatprep.subr.mxu0 %v665
      %v667 = vand.u32 %v235, 4294901760
      %v668 = vsub.f32 %v235, %v667
      %v669 = vand.u32 %v668, 4294901760
      %670 = vmatpush1.msra.mxu0 %v669
      %v671 = vand.u32 %v234, 4294901760
      %v672 = vsub.f32 %v234, %v671
      %v673 = vand.u32 %v672, 4294901760
      %674 = vmatprep.subr.mxu0 %v673
      %v675 = vand.u32 %v233, 4294901760
      %v676 = vsub.f32 %v233, %v675
      %v677 = vand.u32 %v676, 4294901760
      %678 = vmatpush1.msra.mxu0 %v677
      %v679 = vand.u32 %v232, 4294901760
      %v680 = vsub.f32 %v232, %v679
      %v681 = vand.u32 %v680, 4294901760
      %682 = vmatprep.subr.mxu0 %v681
      %v683 = vand.u32 %v231, 4294901760
      %v684 = vsub.f32 %v231, %v683
      %v685 = vand.u32 %v684, 4294901760
      %686 = vmatpush1.msra.mxu0 %v685
      %v687 = vand.u32 %v230, 4294901760
      %v688 = vsub.f32 %v230, %v687
      %v689 = vand.u32 %v688, 4294901760
      %690 = vmatprep.subr.mxu0 %v689
      %v691 = vand.u32 %v229, 4294901760
      %v692 = vsub.f32 %v229, %v691
      %v693 = vand.u32 %v692, 4294901760
      %694 = vmatpush1.msra.mxu0 %v693
      %695 = vmatprep.subr.mxu0 0.0
      %696 = vmatpush2.msra.mxu0 0.0
      %697 = vmatprep.subr.mxu0 0.0
      %698 = vmatpush2.msra.mxu0 0.0
      %699 = vmatprep.subr.mxu0 0.0
      %700 = vmatpush2.msra.mxu0 0.0
      %701 = vmatprep.subr.mxu0 0.0
      %702 = vmatpush2.msra.mxu0 0.0
      %703 = vmatprep.subr.mxu0 0.0
      %704 = vmatpush2.msra.mxu0 0.0
      %705 = vmatprep.subr.mxu0 0.0
      %706 = vmatpush2.msra.mxu0 0.0
      %707 = vmatprep.subr.mxu0 0.0
      %708 = vmatpush2.msra.mxu0 0.0
      %709 = vmatprep.subr.mxu0 0.0
      %710 = vmatpush2.msra.mxu0 0.0
      %711 = vmatprep.subr.mxu0 0.0
      %712 = vmatpush2.msra.mxu0 0.0
      %713 = vmatprep.subr.mxu0 0.0
      %714 = vmatpush2.msra.mxu0 0.0
      %715 = vmatprep.subr.mxu0 0.0
      %716 = vmatpush2.msra.mxu0 0.0
      %717 = vmatprep.subr.mxu0 0.0
      %718 = vmatpush2.msra.mxu0 0.0
      %719 = vmatprep.subr.mxu0 0.0
      %720 = vmatpush2.msra.mxu0 0.0
      %721 = vmatprep.subr.mxu0 0.0
      %722 = vmatpush2.msra.mxu0 0.0
      %723 = vmatprep.subr.mxu0 0.0
      %724 = vmatpush2.msra.mxu0 0.0
      %725 = vmatprep.subr.mxu0 0.0
      %726 = vmatpush2.msra.mxu0 0.0
      %727 = vmatprep.mubr.f32.mxu0 0.0
      %v728 = vand.u32 %v270, 4294901760
      %729 = vmatmul.mubr.f32.gmra.mxu0 %v728
      %v730 = vpop.f32.mrf.mxu0
      %v731 = vadd.f32 %v635, %v730
      %v732 = vpop.f32.mrf.mxu0
      %v733 = vadd.f32 %v637, %v732
      %734 = vdwg.mxu0
      %735 = vmatprep.subr.mxu0 0.0
      %736 = vmatpush1.msra.mxu0 0.0
      %737 = vmatprep.subr.mxu0 0.0
      %738 = vmatpush1.msra.mxu0 0.0
      %739 = vmatprep.subr.mxu0 0.0
      %740 = vmatpush1.msra.mxu0 0.0
      %741 = vmatprep.subr.mxu0 0.0
      %742 = vmatpush1.msra.mxu0 0.0
      %743 = vmatprep.subr.mxu0 0.0
      %744 = vmatpush1.msra.mxu0 0.0
      %745 = vmatprep.subr.mxu0 0.0
      %746 = vmatpush1.msra.mxu0 0.0
      %747 = vmatprep.subr.mxu0 0.0
      %748 = vmatpush1.msra.mxu0 0.0
      %749 = vmatprep.subr.mxu0 0.0
      %750 = vmatpush1.msra.mxu0 0.0
      %751 = vmatprep.subr.mxu0 0.0
      %752 = vmatpush1.msra.mxu0 0.0
      %753 = vmatprep.subr.mxu0 0.0
      %754 = vmatpush1.msra.mxu0 0.0
      %755 = vmatprep.subr.mxu0 0.0
      %756 = vmatpush1.msra.mxu0 0.0
      %757 = vmatprep.subr.mxu0 0.0
      %758 = vmatpush1.msra.mxu0 0.0
      %v759 = vand.u32 %v236, 4294901760
      %760 = vmatprep.subr.mxu0 %v759
      %v761 = vand.u32 %v235, 4294901760
      %762 = vmatpush1.msra.mxu0 %v761
      %v763 = vand.u32 %v234, 4294901760
      %764 = vmatprep.subr.mxu0 %v763
      %v765 = vand.u32 %v233, 4294901760
      %766 = vmatpush1.msra.mxu0 %v765
      %v767 = vand.u32 %v232, 4294901760
      %768 = vmatprep.subr.mxu0 %v767
      %v769 = vand.u32 %v231, 4294901760
      %770 = vmatpush1.msra.mxu0 %v769
      %v771 = vand.u32 %v230, 4294901760
      %772 = vmatprep.subr.mxu0 %v771
      %v773 = vand.u32 %v229, 4294901760
      %774 = vmatpush1.msra.mxu0 %v773
      %775 = vmatprep.subr.mxu0 0.0
      %776 = vmatpush2.msra.mxu0 0.0
      %777 = vmatprep.subr.mxu0 0.0
      %778 = vmatpush2.msra.mxu0 0.0
      %779 = vmatprep.subr.mxu0 0.0
      %780 = vmatpush2.msra.mxu0 0.0
      %781 = vmatprep.subr.mxu0 0.0
      %782 = vmatpush2.msra.mxu0 0.0
      %783 = vmatprep.subr.mxu0 0.0
      %784 = vmatpush2.msra.mxu0 0.0
      %785 = vmatprep.subr.mxu0 0.0
      %786 = vmatpush2.msra.mxu0 0.0
      %787 = vmatprep.subr.mxu0 0.0
      %788 = vmatpush2.msra.mxu0 0.0
      %789 = vmatprep.subr.mxu0 0.0
      %790 = vmatpush2.msra.mxu0 0.0
      %791 = vmatprep.subr.mxu0 0.0
      %792 = vmatpush2.msra.mxu0 0.0
      %793 = vmatprep.subr.mxu0 0.0
      %794 = vmatpush2.msra.mxu0 0.0
      %795 = vmatprep.subr.mxu0 0.0
      %796 = vmatpush2.msra.mxu0 0.0
      %797 = vmatprep.subr.mxu0 0.0
      %798 = vmatpush2.msra.mxu0 0.0
      %799 = vmatprep.subr.mxu0 0.0
      %800 = vmatpush2.msra.mxu0 0.0
      %801 = vmatprep.subr.mxu0 0.0
      %802 = vmatpush2.msra.mxu0 0.0
      %803 = vmatprep.subr.mxu0 0.0
      %804 = vmatpush2.msra.mxu0 0.0
      %805 = vmatprep.subr.mxu0 0.0
      %806 = vmatpush2.msra.mxu0 0.0
      %807 = vmatprep.mubr.f32.mxu0 0.0
      %v808 = vand.u32 %v270, 4294901760
      %809 = vmatmul.mubr.f32.gmra.mxu0 %v808
      %v810 = vpop.f32.mrf.mxu0
      %v811 = vadd.f32 %v731, %v810
      %v812 = vpop.f32.mrf.mxu0
      %v813 = vadd.f32 %v733, %v812
      %814 = vdwg.mxu0
      %v815 = vmul.f32 %v811, %v266
      %v816 = vmul.f32 %v813, %v267
      %v817 = vstv %s228
      %v818 = vadd.f32 %v815, %v817
      %v819 = vadd.f32 %v816, %v817
      %820 = vst [vmem:[%s226] sm:$0xff] %v818
      %821 = vst [vmem:[%s226 + $0x8] sm:$0xff] %v819
      %s822 = smul.u32 2, %s20
      %p823 = scmp.lt.s32.totalorder %s19, 1
      %s824 = scalar_select %p823, %s19, 1
      %p825 = scmp.lt.s32.totalorder %s822, 1
      %s826 = scalar_select %p825, %s822, 1
      %s827 = smul.addr %s824, 2
      %s828 = sadd.s32 %s826, %s827
      %s829 = smul.addr %s828, 8
      %s830 = scalar_lea.vmem %s3, %s829
      // Predicated region
      $region33: #{contrastive_head.1} parent=31 // pred_check
        %p831 = pneg %p122
      $region34: #{contrastive_head.1} parent=31 // pred_check_branch
        %833 = sbr.rel (%p831) target = $region36
      $region35: #{contrastive_head.1} parent=31 // pred_region
        %s834 = smul.u32 2, %s20
      $region36: #{contrastive_head.1} parent=31 // pred_fallthru
        _
    $region32: #{contrastive_head.1} parent=5 // pred_fallthru
      _
    %p835 = scmp.le.s32.totalorder 2, %s10
    // Predicated region
    $region37: #{contrastive_head.1} parent=5 // pred_check
      %p836 = pneg %p835
    $region38: #{contrastive_head.1} parent=5 // pred_check_branch
      %838 = sbr.rel (%p836) target = $region40
    $region39: #{contrastive_head.1} parent=5 // pred_region
      %s839 = ssub.s32 %s10, 2
      // Predicated region
      $region41: #{contrastive_head.1} parent=39 // pred_check
        %p840 = pneg %p128
      $region42: #{contrastive_head.1} parent=39 // pred_check_branch
        %842 = sbr.rel (%p840) target = $region44
      $region43: #{contrastive_head.1} parent=39 // pred_region
        %s843 = smul.u32 2, %s22
        %p844 = scmp.lt.s32.totalorder %s21, 1
        %s845 = scalar_select %p844, %s21, 1
        %p846 = scmp.lt.s32.totalorder %s843, 1
        %s847 = scalar_select %p846, %s843, 1
        %s848 = smul.addr %s845, 2
        %s849 = sadd.s32 %s847, %s848
        %s850 = smul.addr %s849, 8
        %s851 = scalar_lea.vmem %s3, %s850
      $region44: #{contrastive_head.1} parent=39 // pred_fallthru
        _
    $region40: #{contrastive_head.1} parent=5 // pred_fallthru
      _
  $region6: #{contrastive_head.1} parent=0 // loop_footer
    %s14 = sadd.s32 1, %s10
  $region7: #{contrastive_head.1} parent=0 // loop_footer_branch
    %9 = sbr.rel target = $region3
  $region8: #{contrastive_head.1} parent=0 // loop_exit
    _

</llo_original>
